<compile_context>
chip_gen: v5e
topology: v5e:2x2
jax: 0.10.0
libtpu: 0.0.40
codegen_flags: <defaults>
</compile_context>

<pallas_src>
import functools
import math

import jax
import jax.numpy as jnp
from jax.experimental import pallas as pl
from jax.experimental.pallas import tpu as pltpu

_LANES = 128                      # TPU vreg lane width
_DEFAULT_BLOCK_BYTES = 2 << 20    # ~2 MiB streamed per grid step


def _round_up(v, m):
    return ((v + m - 1) // m) * m


def _leaky_relu_02(x):
    # Default activation used by PEinGAN's _FusedAct: LeakyReLU(negative_slope=0.2).
    return jnp.where(x >= 0, x, x * 0.2)


def _fused_act_kernel(x_ref, o_ref, *, act, scale):
    x = x_ref[...]
    # Activation + scale fused in one VPU pass over the tile.
    # `scale` is a Python float (weak type) so no dtype promotion happens.
    o_ref[...] = (act(x) * scale).astype(o_ref.dtype)


def _pick_lane_width(n):
    """Widest multiple of 128 that evenly divides n (fewer, longer DMA rows)."""
    for w in (1024, 512, 256, _LANES):
        if n % w == 0:
            return w
    return None  # ragged: needs the (rare) padded fallback


def _pick_block_rows(rows, lane_w, itemsize, block_bytes):
    """Row-tile height: dtype-aware sublane multiple, ~block_bytes per block,
    and >= 2 grid steps on mid/large inputs so v7x's 2 TensorCores share work."""
    sub = max(8, 32 // max(1, itemsize))                      # 8 f32 / 16 bf16 / 32 int8
    tm_target = max(sub, ((block_bytes // (lane_w * itemsize)) // sub) * sub)
    if rows <= tm_target:
        if rows <= 2 * sub:
            return rows                                       # one full-height block
        return _round_up(pl.cdiv(rows, 2), sub)               # ~2 blocks for v7x
    return tm_target


def fused_act(x, act=None, *, scale=math.sqrt(2.0),
              block_bytes=_DEFAULT_BLOCK_BYTES):
    """y = act(x) * scale, elementwise, any input shape.

    `act` must be a JAX-traceable elementwise function (defaults to
    LeakyReLU(0.2), the activation _FusedAct is instantiated with in PEinGAN).
    """
    # TODO(synk): arbitrary torch nn.Module activations cannot be translated;
    # only JAX-traceable elementwise callables are supported here.
    if act is None:
        act = _leaky_relu_02

    orig_shape = x.shape
    n = x.size
    itemsize = jnp.dtype(x.dtype).itemsize

    lane_w = _pick_lane_width(n)
    padded = lane_w is None
    if padded:
        # Rare ragged case: pad the flat view up to the next multiple of 128
        # only (NOT up to a full tile).  Padded zeros run through act(); for
        # LeakyReLU that is benign and the pad region is discarded below.
        lane_w = _LANES
        n_stream = _round_up(n, lane_w)
        x2d = jnp.pad(x.reshape(-1), (0, n_stream - n)).reshape(-1, lane_w)
    else:
        n_stream = n
        x2d = x.reshape(-1, lane_w)          # pure metadata reshape, no HBM pass

    rows = n_stream // lane_w
    tm = _pick_block_rows(rows, lane_w, itemsize, block_bytes)
    grid = (pl.cdiv(rows, tm),)              # ragged last block handled by Pallas

    kernel = functools.partial(_fused_act_kernel, act=act, scale=float(scale))

    out2d = pl.pallas_call(
        kernel,
        out_shape=jax.ShapeDtypeStruct((rows, lane_w), x.dtype),
        grid_spec=pltpu.PrefetchScalarGridSpec(
            num_scalar_prefetch=0,
            grid=grid,
            in_specs=[pl.BlockSpec((tm, lane_w), lambda i: (i, 0))],
            out_specs=pl.BlockSpec((tm, lane_w), lambda i: (i, 0)),
        ),
        compiler_params=pltpu.CompilerParams(
            dimension_semantics=("parallel",),
        ),
        cost_estimate=pl.CostEstimate(
            flops=2 * n_stream,                         # compare/select + scale mul
            transcendentals=0,
            bytes_accessed=2 * n_stream * itemsize,     # actual streamed read + write
        ),
    )(x2d)

    if padded:
        return out2d.reshape(-1)[:n].reshape(orig_shape)
    return out2d.reshape(orig_shape)


if __name__ == "__main__":
    key = jax.random.PRNGKey(0)

    # Small shape consistent with a GAN feature map: (batch, channels, H, W).
    batch, channels, spatial = 2, 4, 16
    x = jax.random.normal(key, (batch, channels, spatial, spatial),
                          dtype=jnp.float32)

    scale = math.sqrt(2.0)
    out = fused_act(x, scale=scale)
    out = jax.block_until_ready(out)

    # Pure-JAX reference of the exact PyTorch semantics:
    #   LeakyReLU(0.2)(x) * sqrt(2)
    ref = jnp.where(x >= 0, x, 0.2 * x) * scale
    assert out.shape == x.shape
    assert out.dtype == x.dtype
    assert jnp.allclose(out, ref, atol=1e-6, rtol=1e-6)

    # Also exercise a ragged size (forces the padded fallback path) and a
    # bf16 input (dtype-aware sublane rounding, no upcast).
    x_ragged = jax.random.normal(jax.random.PRNGKey(1), (3, 5, 7), jnp.float32)
    out_r = jax.block_until_ready(fused_act(x_ragged, scale=scale))
    ref_r = jnp.where(x_ragged >= 0, x_ragged, 0.2 * x_ragged) * scale
    assert jnp.allclose(out_r, ref_r, atol=1e-6, rtol=1e-6)

    x_bf16 = x.astype(jnp.bfloat16)
    out_b = jax.block_until_ready(fused_act(x_bf16, scale=scale))
    assert out_b.dtype == jnp.bfloat16

    print("KERNEL_OK")
</pallas_src>

<mosaic_0001>
module attributes {stable_mosaic.version = 11 : i64} {
  func.func @_fused_act_kernel(%arg0: i32, %arg1: memref<2x1024xf32, #tpu.memory_space<vmem>>, %arg2: memref<2x1024xf32, #tpu.memory_space<vmem>>) attributes {dimension_semantics = [#tpu.dimension_semantics<parallel>], iteration_bounds = array<i64: 1>, scalar_prefetch = 0 : i64, scratch_operands = 0 : i64, tpu.core_type = #tpu.core_type<tc>, window_params = [{transform_indices = @transform_0, window_bounds = array<i64: 2, 1024>}, {transform_indices = @transform_1, window_bounds = array<i64: 2, 1024>}]} {
    %c0 = arith.constant 0 : index
    %c0_0 = arith.constant 0 : index
    %0 = vector.load %arg1[%c0, %c0_0] : memref<2x1024xf32, #tpu.memory_space<vmem>>, vector<2x1024xf32>
    %cst = arith.constant 0.000000e+00 : f32
    %1 = vector.broadcast %cst : f32 to vector<2x1024xf32>
    %2 = arith.cmpf oge, %0, %1 : vector<2x1024xf32>
    %cst_1 = arith.constant 2.000000e-01 : f32
    %3 = vector.broadcast %cst_1 : f32 to vector<2x1024xf32>
    %4 = arith.mulf %0, %3 : vector<2x1024xf32>
    %5 = arith.select %2, %0, %4 : vector<2x1024xi1>, vector<2x1024xf32>
    %cst_2 = arith.constant 1.41421354 : f32
    %6 = vector.broadcast %cst_2 : f32 to vector<2x1024xf32>
    %7 = arith.mulf %5, %6 : vector<2x1024xf32>
    %c0_3 = arith.constant 0 : index
    %c0_4 = arith.constant 0 : index
    %8 = vector.load %arg2[%c0_3, %c0_4] : memref<2x1024xf32, #tpu.memory_space<vmem>>, vector<2x1024xf32>
    tpu.vector_store %arg2[%c0_3, %c0_4], %7 {strides = array<i32>} : memref<2x1024xf32, #tpu.memory_space<vmem>>, vector<2x1024xf32>,
    return
  }
  func.func @transform_0(%arg0: i32) -> (i32, i32) {
    %c0_i32 = arith.constant 0 : i32
    %c0_i32_0 = arith.constant 0 : i32
    return %arg0, %c0_i32 : i32, i32
  }
  func.func @transform_1(%arg0: i32) -> (i32, i32) {
    %c0_i32 = arith.constant 0 : i32
    %c0_i32_0 = arith.constant 0 : i32
    return %arg0, %c0_i32 : i32, i32
  }
}

</mosaic_0001>

<llo_original>
// kernel: tpu_custom_call.1
$region0: #{tpu_custom_call.1}
  #allocation0 [shape = 'u32[]', space=smem, size = 0x4, offset = 0x4, fixed_abs, tag = 'smem constant byte address 0x4 - core index']
  #allocation1 [shape = 'u32[72,128]{1,0:T(1,128)}', space=vmem, size = 0x9000, scoped, tag = 'internal scratch']
  %s0 = inlined_call_operand.hbm [shape: f32[2,1024], index: 0, kind: input, shape index: {}]
  %s1 = inlined_call_operand.hbm [shape: f32[2,1024], index: 1, kind: output, shape index: {}]
  %s2 = sld [smem:[#allocation0]]
  $region18: #{tpu_custom_call.1} parent=0
    _
  %s4 = ssub.s32 1, %s2
  %s5 = scalar_select 0, %s4, %s2
  $region1: #{tpu_custom_call.1} parent=0
    #allocation2 [shape = 'u8[8192]{0}', space=vmem, size = 0x2000, scoped, tag = 'input window, operand 0, single buffered']
    #allocation3 [shape = 's32[1]{0}', space=sflag, size = 0x4, scoped, tag = 'scoped memory for tpu_custom_call.1']
    #allocation4 [shape = 's32[1]{0}', space=sflag, size = 0x4, scoped, tag = 'scoped memory for tpu_custom_call.1']
    #allocation5 [shape = 'u8[8192]{0}', space=vmem, size = 0x2000, scoped, tag = 'output window, operand 0, single buffered']
    %6 = vsyncpa [#allocation3], 0
    %7 = vsyncpa [#allocation4], 0
    // Predicated region
    $region2: #{tpu_custom_call.1} parent=1 // pred_check
      _
    $region3: #{tpu_custom_call.1} parent=1 // pred_check_branch
      %9 = sbr.rel (0) target = $region5
    $region4: #{tpu_custom_call.1} parent=1 // pred_region
      %11 = vsyncadd [#allocation3], 0
      %s13 = sshll.u32 %s0, 4
      %s14 = int_to_ptr.hbm [resolvable:$true] %s13
      %s15 = sshll.u32 [#allocation2], 4
      %s16 = int_to_ptr.vmem [resolvable:$true] %s15
      %18 = dma.hbm_to_vmem [thread:$0]  %s14, 256, %s16, [#allocation3]
    $region5: #{tpu_custom_call.1} parent=1 // pred_fallthru
      _
    // Predicated region
    $region6: #{tpu_custom_call.1} parent=1 // pred_check
      _
    $region7: #{tpu_custom_call.1} parent=1 // pred_check_branch
      %20 = sbr.rel (0) target = $region9
    $region8: #{tpu_custom_call.1} parent=1 // pred_region
      %22 = dma.done [#allocation3], 256
    $region9: #{tpu_custom_call.1} parent=1 // pred_fallthru
      _
    %v23 = vld [vmem:[#allocation2] sm:$0xff]
    %v24 = vld [vmem:[#allocation2 + $0x8] sm:$0xff]
    %vm25 = vcmp.ge.f32.partialorder %v23, 0.0
    %vm26 = vcmp.ge.f32.partialorder %v24, 0.0
    %v27 = vmul.f32 %v23, 0.2
    %v28 = vmul.f32 %v24, 0.2
    %v29 = vsel %vm25, %v23, %v27
    %v30 = vsel %vm26, %v24, %v28
    %v31 = vmul.f32 %v29, 1.4142135
    %v32 = vmul.f32 %v30, 1.4142135
    %33 = vst [vmem:[#allocation5] sm:$0xff] %v31
    %34 = vst [vmem:[#allocation5 + $0x8] sm:$0xff] %v32
    // Predicated region
    $region10: #{tpu_custom_call.1} parent=1 // pred_check
      _
    $region11: #{tpu_custom_call.1} parent=1 // pred_check_branch
      %36 = sbr.rel (0) target = $region13
    $region12: #{tpu_custom_call.1} parent=1 // pred_region
      %38 = vsyncadd [#allocation4], 0
      %s40 = sshll.u32 [#allocation5], 4
      %s41 = int_to_ptr.vmem [resolvable:$true] %s40
      %s42 = sshll.u32 %s1, 4
      %s43 = int_to_ptr.hbm [resolvable:$true] %s42
      %45 = dma.vmem_to_hbm [thread:$0]  %s41, 256, %s43, [#allocation4]
    $region13: #{tpu_custom_call.1} parent=1 // pred_fallthru
      _
    // Predicated region
    $region14: #{tpu_custom_call.1} parent=1 // pred_check
      _
    $region15: #{tpu_custom_call.1} parent=1 // pred_check_branch
      %47 = sbr.rel (0) target = $region17
    $region16: #{tpu_custom_call.1} parent=1 // pred_region
      %49 = dma.done [#allocation4], 256
    $region17: #{tpu_custom_call.1} parent=1 // pred_fallthru
      _
    %50 = vsyncpa [#allocation3], 1
    %51 = vsyncpa [#allocation4], 1

</llo_original>
